<compile_context>
chip_gen: v7x
topology: tpu7x:2x2x1
jax: 0.10.0
libtpu: 0.0.40
codegen_flags: <defaults>
</compile_context>

<pallas_src>
import functools
import math

import jax
import jax.numpy as jnp
import numpy as np
from jax import lax
from jax.experimental import pallas as pl
from jax.experimental.pallas import tpu as pltpu


# ---------------------------------------------------------------------------
# Sizing heuristics
# ---------------------------------------------------------------------------

_PIPELINE_VMEM_BUDGET_BYTES = 16 * 1024 * 1024  # total for the ~4 pipeline bufs
_MIN_GRID_STEPS = 8      # >= 4 steps per v7x TensorCore keeps double-buffering
_MIN_BLOCK_ROWS = 512    # keep per-step overhead (~0.35us) amortized
_MIN_TILE_HW = 512       # keep strided-row DMA descriptors amortized
_MAX_PACKED_LANES = 512  # cap on P = lcm(C, 128) for lane packing
_MAX_GROUPS = 16         # cap on static unroll of per-group reductions


def _round_up(x, m):
    return (x + m - 1) // m * m


@functools.lru_cache(maxsize=1)
def _vmem_limit_bytes():
    """Generation-aware scoped-VMEM cap with a conservative fallback."""
    try:
        cap = int(pltpu.get_tpu_info().vmem_capacity_bytes)
        return max(32 * 1024 * 1024, min(cap * 3 // 4, 96 * 1024 * 1024))
    except Exception:
        return 48 * 1024 * 1024  # safe on v5e/v6e/v7x


def _sublane_granularity(itemsize):
    # f32 -> 8, bf16 -> 16, int8/fp8 -> 32 (native sublane packing).
    return max(8, 32 // max(1, itemsize))


def _per_buffer_budget(itemsize):
    # Sub-32-bit inputs are upcast to f32 inside the kernel, adding ~2-3x the
    # input-block bytes of temporaries on top of the 4 pipeline buffers.
    divisor = 4 if itemsize >= 4 else 8
    return _PIPELINE_VMEM_BUDGET_BYTES // divisor


def _pick_block_rows(n_rows, row_bytes, itemsize):
    """Rows per grid step for the (rows, P) channels_last kernel."""
    sub = _sublane_granularity(itemsize)
    block = max(sub, _per_buffer_budget(itemsize) // row_bytes)
    # Guarantee >= ~8 grid steps when there is enough work, but never drop
    # below ~512 rows per block.
    if n_rows > _MIN_GRID_STEPS * _MIN_BLOCK_ROWS:
        block = min(block, max(_MIN_BLOCK_ROWS, pl.cdiv(n_rows, _MIN_GRID_STEPS)))
    block = _round_up(block, sub)
    if block >= n_rows:
        return n_rows  # single full-extent block (always a legal block shape)
    return block


def _pick_tile_hw(hw, n_batch, c_row_bytes, itemsize):
    """Lane tile for the channels_first kernel (multiple of 128 or full hw)."""
    per_buf = _per_buffer_budget(itemsize)
    t = max(128, (per_buf // max(1, c_row_bytes)) // 128 * 128)
    # Guarantee >= ~8 total grid steps when the batch axis alone does not
    # provide them, but keep >= ~512 contiguous lanes per strided DMA row.
    if n_batch * pl.cdiv(hw, t) < _MIN_GRID_STEPS and hw > _MIN_TILE_HW:
        tiles_wanted = pl.cdiv(_MIN_GRID_STEPS, n_batch)
        t_steps = _round_up(pl.cdiv(hw, tiles_wanted), 128)
        t = max(_MIN_TILE_HW, min(t, t_steps))
    if t >= hw:
        return hw
    return t


# ---------------------------------------------------------------------------
# Kernels
# ---------------------------------------------------------------------------

def _ln_rows_kernel(x_ref, w_ref, b_ref, o_ref, *, eps, groups, group_size):
    """LayerNorm over contiguous lane-groups of width `group_size`.

    x_ref: (block_rows, groups * group_size).  Each lane-group of
    `group_size` channels is an independent LayerNorm instance.  groups == 1
    is the plain last-dim LayerNorm; groups > 1 is the lane-dense packed path
    (P = lcm(C, 128)).
    """
    x = x_ref[...].astype(jnp.float32)
    w = w_ref[...].astype(jnp.float32)
    b = b_ref[...].astype(jnp.float32)
    c = group_size
    if groups == 1:
        mu = jnp.mean(x, axis=-1, keepdims=True)
        xc = x - mu
        var = jnp.mean(xc * xc, axis=-1, keepdims=True)   # biased var (torch)
        y = xc * lax.rsqrt(var + eps)
    else:
        # Static unroll over a small number of lane-groups (G <= 16, and
        # G <= 8 for ConvNeXt channel counts).  The kernel is HBM-bound, so
        # the XLU/VPU cost of the lane slices/concat is hidden; revisit with
        # an MXU block-diagonal matmul only if a bundle dump shows otherwise.
        pieces = []
        for g in range(groups):
            xg = x[:, g * c:(g + 1) * c]
            mu = jnp.mean(xg, axis=-1, keepdims=True)
            xc = xg - mu
            var = jnp.mean(xc * xc, axis=-1, keepdims=True)
            pieces.append(xc * lax.rsqrt(var + eps))
        y = jnp.concatenate(pieces, axis=-1)
    o_ref[...] = (y * w + b).astype(o_ref.dtype)


def _ln_cfirst_kernel(x_ref, w_ref, b_ref, o_ref, *, eps):
    """LayerNorm over the channel (sublane) axis of a (1, C, hw_tile) block."""
    x = x_ref[...].astype(jnp.float32)                      # (1, C, T)
    mu = jnp.mean(x, axis=1, keepdims=True)                 # (1, 1, T)
    xc = x - mu
    var = jnp.mean(xc * xc, axis=1, keepdims=True)          # biased var (torch)
    y = xc * lax.rsqrt(var + eps)
    y = y * w_ref[...].astype(jnp.float32) + b_ref[...].astype(jnp.float32)
    o_ref[...] = y.astype(o_ref.dtype)


# ---------------------------------------------------------------------------
# Wrappers
# ---------------------------------------------------------------------------

@functools.partial(jax.jit, static_argnames=("eps",))
def _layernorm_lastdim(x2d, weight, bias, *, eps):
    """LayerNorm over the last dim of a (N, C) array."""
    N, C = x2d.shape
    itemsize = jnp.dtype(x2d.dtype).itemsize

    # Lane-dense packing: view (N, C) as (N // G, P) with P = lcm(C, 128)
    # (a free contiguous reshape) so HBM loads/stores use full 128-lane vregs
    # instead of masked partial ones.  Covers ConvNeXt's C = 32/96/192.
    groups, P = 1, C
    if C % 128 != 0:
        p = math.lcm(C, 128)
        g = p // C
        if p <= _MAX_PACKED_LANES and g <= _MAX_GROUPS and N % g == 0:
            groups, P = g, p
    rows = N // groups

    xr = x2d.reshape(rows, P)
    wr = jnp.tile(weight.astype(jnp.float32).reshape(1, C), (1, groups))
    br = jnp.tile(bias.astype(jnp.float32).reshape(1, C), (1, groups))

    block_rows = _pick_block_rows(rows, P * itemsize, itemsize)
    grid = (pl.cdiv(rows, block_rows),)

    out = pl.pallas_call(
        functools.partial(_ln_rows_kernel, eps=eps, groups=groups, group_size=C),
        out_shape=jax.ShapeDtypeStruct((rows, P), x2d.dtype),
        grid_spec=pltpu.PrefetchScalarGridSpec(
            num_scalar_prefetch=0,
            grid=grid,
            in_specs=[
                pl.BlockSpec((block_rows, P), lambda i: (i, 0)),
                pl.BlockSpec((1, P), lambda i: (0, 0)),
                pl.BlockSpec((1, P), lambda i: (0, 0)),
            ],
            out_specs=pl.BlockSpec((block_rows, P), lambda i: (i, 0)),
        ),
        compiler_params=pltpu.CompilerParams(
            dimension_semantics=("parallel",),
            vmem_limit_bytes=_vmem_limit_bytes()),
        cost_estimate=pl.CostEstimate(
            flops=int(8 * N * C),
            transcendentals=int(N),
            bytes_accessed=int(2 * N * C * itemsize)),
    )(xr, wr, br)
    return out.reshape(N, C)


@functools.partial(jax.jit, static_argnames=("eps",))
def _layernorm_channels_first(x, weight, bias, *, eps):
    """LayerNorm over the channel axis of (B, C, H, W) with no HBM transposes."""
    B, C, H, W = x.shape
    HW = H * W
    itemsize = jnp.dtype(x.dtype).itemsize

    x3 = x.reshape(B, C, HW)                                 # free reshape
    w3 = weight.astype(jnp.float32).reshape(1, C, 1)
    b3 = bias.astype(jnp.float32).reshape(1, C, 1)

    tile_hw = _pick_tile_hw(HW, B, C * itemsize, itemsize)
    grid = (B, pl.cdiv(HW, tile_hw))

    out = pl.pallas_call(
        functools.partial(_ln_cfirst_kernel, eps=eps),
        out_shape=jax.ShapeDtypeStruct((B, C, HW), x.dtype),
        grid_spec=pltpu.PrefetchScalarGridSpec(
            num_scalar_prefetch=0,
            grid=grid,
            in_specs=[
                pl.BlockSpec((1, C, tile_hw), lambda b, j: (b, 0, j)),
                pl.BlockSpec((1, C, 1), lambda b, j: (0, 0, 0)),
                pl.BlockSpec((1, C, 1), lambda b, j: (0, 0, 0)),
            ],
            out_specs=pl.BlockSpec((1, C, tile_hw), lambda b, j: (b, 0, j)),
        ),
        compiler_params=pltpu.CompilerParams(
            dimension_semantics=("parallel", "parallel"),
            vmem_limit_bytes=_vmem_limit_bytes()),
        cost_estimate=pl.CostEstimate(
            flops=int(8 * B * C * HW),
            transcendentals=int(B * HW),
            bytes_accessed=int(2 * B * C * HW * itemsize)),
    )(x3, w3, b3)
    return out.reshape(B, C, H, W)


class LayerNormPallas:
    """Pallas port of the ConvNeXt LayerNorm (channels_last / channels_first)."""

    def __init__(self, normalized_shape, eps=1e-6, data_format="channels_last",
                 weight=None, bias=None):
        if data_format not in ("channels_last", "channels_first"):
            raise NotImplementedError
        self.eps = float(eps)
        self.data_format = data_format
        self.normalized_shape = (normalized_shape,)
        # nn.Module init: weight = ones, bias = zeros (overridable for testing).
        self.weight = (jnp.ones((normalized_shape,), jnp.float32)
                       if weight is None else jnp.asarray(weight, jnp.float32))
        self.bias = (jnp.zeros((normalized_shape,), jnp.float32)
                     if bias is None else jnp.asarray(bias, jnp.float32))

    def __call__(self, x):
        if self.data_format == "channels_last":
            C = x.shape[-1]
            lead = x.shape[:-1]
            y = _layernorm_lastdim(x.reshape(-1, C), self.weight, self.bias,
                                   eps=self.eps)
            return y.reshape(*lead, C)
        else:
            return _layernorm_channels_first(x, self.weight, self.bias,
                                             eps=self.eps)


# ---------------------------------------------------------------------------
# Pure-JAX references (match the PyTorch module semantics)
# ---------------------------------------------------------------------------

def _ref_channels_last(x, w, b, eps):
    x = x.astype(jnp.float32)
    mu = x.mean(-1, keepdims=True)
    var = ((x - mu) ** 2).mean(-1, keepdims=True)
    return (x - mu) / jnp.sqrt(var + eps) * w + b


def _ref_channels_first(x, w, b, eps):
    x = x.astype(jnp.float32)
    u = x.mean(1, keepdims=True)
    s = ((x - u) ** 2).mean(1, keepdims=True)
    xn = (x - u) / jnp.sqrt(s + eps)
    return w[:, None, None] * xn + b[:, None, None]


if __name__ == "__main__":
    key = jax.random.PRNGKey(0)
    k1, k2, k3, k4, k5, k6, k7, k8 = jax.random.split(key, 8)
    eps = 1e-6

    # 1) channels_last, C=32 -> packed lane-dense path (G=4, P=128).
    C = 32
    w = 1.0 + 0.1 * jax.random.normal(k3, (C,), jnp.float32)
    b = 0.1 * jax.random.normal(k4, (C,), jnp.float32)
    x_cl = jax.random.normal(k1, (2, 8, 8, C), jnp.float32)
    ln_cl = LayerNormPallas(C, eps=eps, data_format="channels_last",
                            weight=w, bias=b)
    y_cl = jax.block_until_ready(ln_cl(x_cl))
    np.testing.assert_allclose(
        np.asarray(y_cl), np.asarray(_ref_channels_last(x_cl, w, b, eps)),
        rtol=1e-5, atol=1e-5)

    # 2) channels_last, C=48 with N not divisible by G=8 -> generic
    #    (full-extent last dim) path.
    C2 = 48
    w2 = 1.0 + 0.1 * jax.random.normal(k5, (C2,), jnp.float32)
    b2 = 0.05 * jax.random.normal(k6, (C2,), jnp.float32)
    x_cl2 = jax.random.normal(k2, (3, 25, 25, C2), jnp.float32)
    ln_cl2 = LayerNormPallas(C2, eps=eps, data_format="channels_last",
                             weight=w2, bias=b2)
    y_cl2 = jax.block_until_ready(ln_cl2(x_cl2))
    np.testing.assert_allclose(
        np.asarray(y_cl2), np.asarray(_ref_channels_last(x_cl2, w2, b2, eps)),
        rtol=1e-5, atol=1e-5)

    # 3) channels_last, ConvNeXt-like C=96 -> lcm packing (G=4, P=384),
    #    multi-step grid with a partial last rows-block.
    C3 = 96
    w3 = 1.0 + 0.1 * jax.random.normal(k7, (C3,), jnp.float32)
    b3 = 0.05 * jax.random.normal(k8, (C3,), jnp.float32)
    x_cl3 = jax.random.normal(k1, (7, 48, 45, C3), jnp.float32)
    ln_cl3 = LayerNormPallas(C3, eps=eps, data_format="channels_last",
                             weight=w3, bias=b3)
    y_cl3 = jax.block_until_ready(ln_cl3(x_cl3))
    np.testing.assert_allclose(
        np.asarray(y_cl3), np.asarray(_ref_channels_last(x_cl3, w3, b3, eps)),
        rtol=1e-5, atol=1e-5)

    # 4) channels_last, C=192 in bfloat16 -> packed (G=2, P=384) bf16 path.
    C4 = 192
    w4 = 1.0 + 0.1 * jax.random.normal(k5, (C4,), jnp.float32)
    b4 = 0.05 * jax.random.normal(k6, (C4,), jnp.float32)
    x_cl4 = jax.random.normal(k2, (2, 8, 8, C4), jnp.float32).astype(jnp.bfloat16)
    ln_cl4 = LayerNormPallas(C4, eps=eps, data_format="channels_last",
                             weight=w4, bias=b4)
    y_cl4 = jax.block_until_ready(ln_cl4(x_cl4))
    np.testing.assert_allclose(
        np.asarray(y_cl4.astype(jnp.float32)),
        np.asarray(_ref_channels_last(x_cl4, w4, b4, eps)),
        rtol=2e-2, atol=3e-2)

    # 5) channels_first, small spatial extent -> sublane-reduction kernel.
    x_cf = jax.random.normal(k2, (2, C, 8, 8), jnp.float32)
    ln_cf = LayerNormPallas(C, eps=eps, data_format="channels_first",
                            weight=w, bias=b)
    y_cf = jax.block_until_ready(ln_cf(x_cf))
    np.testing.assert_allclose(
        np.asarray(y_cf), np.asarray(_ref_channels_first(x_cf, w, b, eps)),
        rtol=1e-5, atol=1e-5)

    # 6) channels_first, larger H*W -> multiple lane tiles incl. a partial one,
    #    >= 8 grid steps for v7x megacore pipelining.
    x_cf2 = jax.random.normal(k1, (2, C3, 80, 60), jnp.float32)
    ln_cf2 = LayerNormPallas(C3, eps=eps, data_format="channels_first",
                             weight=w3, bias=b3)
    y_cf2 = jax.block_until_ready(ln_cf2(x_cf2))
    np.testing.assert_allclose(
        np.asarray(y_cf2), np.asarray(_ref_channels_first(x_cf2, w3, b3, eps)),
        rtol=1e-5, atol=1e-5)

    print("KERNEL_OK")
</pallas_src>

<mosaic_0001>
module attributes {stable_mosaic.version = 11 : i64} {
  func.func @_ln_rows_kernel(%arg0: i32, %arg1: memref<32x128xf32, #tpu.memory_space<vmem>>, %arg2: memref<1x128xf32, #tpu.memory_space<vmem>>, %arg3: memref<1x128xf32, #tpu.memory_space<vmem>>, %arg4: memref<32x128xf32, #tpu.memory_space<vmem>>) attributes {dimension_semantics = [#tpu.dimension_semantics<parallel>], iteration_bounds = array<i64: 1>, scalar_prefetch = 0 : i64, scratch_operands = 0 : i64, tpu.core_type = #tpu.core_type<tc>, window_params = [{transform_indices = @transform_0, window_bounds = array<i64: 32, 128>}, {pipeline_mode = #tpu.pipeline_mode<synchronous>, transform_indices = @transform_1, window_bounds = array<i64: 1, 128>}, {pipeline_mode = #tpu.pipeline_mode<synchronous>, transform_indices = @transform_2, window_bounds = array<i64: 1, 128>}, {transform_indices = @transform_3, window_bounds = array<i64: 32, 128>}]} {
    %c0 = arith.constant 0 : index
    %c0_0 = arith.constant 0 : index
    %0 = vector.load %arg1[%c0, %c0_0] : memref<32x128xf32, #tpu.memory_space<vmem>>, vector<32x128xf32>
    %c0_1 = arith.constant 0 : index
    %c0_2 = arith.constant 0 : index
    %1 = vector.load %arg2[%c0_1, %c0_2] : memref<1x128xf32, #tpu.memory_space<vmem>>, vector<1x128xf32>
    %c0_3 = arith.constant 0 : index
    %c0_4 = arith.constant 0 : index
    %2 = vector.load %arg3[%c0_3, %c0_4] : memref<1x128xf32, #tpu.memory_space<vmem>>, vector<1x128xf32>
    %3 = vector.extract_strided_slice %0 {offsets = [0, 0], sizes = [32, 32], strides = [1, 1]} : vector<32x128xf32> to vector<32x32xf32>
    %cst = arith.constant dense<0.000000e+00> : vector<32xf32>
    %4 = vector.multi_reduction <add>, %3, %cst [1] : vector<32x32xf32> to vector<32xf32>
    %5 = vector.shape_cast %4 : vector<32xf32> to vector<32x1xf32>
    %cst_5 = arith.constant 3.200000e+01 : f32
    %6 = vector.broadcast %cst_5 : f32 to vector<32x1xf32>
    %7 = arith.divf %5, %6 : vector<32x1xf32>
    %8 = vector.broadcast %7 : vector<32x1xf32> to vector<32x32xf32>
    %9 = arith.subf %3, %8 : vector<32x32xf32>
    %10 = arith.mulf %9, %9 : vector<32x32xf32>
    %cst_6 = arith.constant dense<0.000000e+00> : vector<32xf32>
    %11 = vector.multi_reduction <add>, %10, %cst_6 [1] : vector<32x32xf32> to vector<32xf32>
    %12 = vector.shape_cast %11 : vector<32xf32> to vector<32x1xf32>
    %cst_7 = arith.constant 3.200000e+01 : f32
    %13 = vector.broadcast %cst_7 : f32 to vector<32x1xf32>
    %14 = arith.divf %12, %13 : vector<32x1xf32>
    %cst_8 = arith.constant 9.99999997E-7 : f32
    %15 = vector.broadcast %cst_8 : f32 to vector<32x1xf32>
    %16 = arith.addf %14, %15 : vector<32x1xf32>
    %17 = math.rsqrt %16 : vector<32x1xf32>
    %18 = vector.broadcast %17 : vector<32x1xf32> to vector<32x32xf32>
    %19 = arith.mulf %9, %18 : vector<32x32xf32>
    %20 = vector.extract_strided_slice %0 {offsets = [0, 32], sizes = [32, 32], strides = [1, 1]} : vector<32x128xf32> to vector<32x32xf32>
    %cst_9 = arith.constant dense<0.000000e+00> : vector<32xf32>
    %21 = vector.multi_reduction <add>, %20, %cst_9 [1] : vector<32x32xf32> to vector<32xf32>
    %22 = vector.shape_cast %21 : vector<32xf32> to vector<32x1xf32>
    %cst_10 = arith.constant 3.200000e+01 : f32
    %23 = vector.broadcast %cst_10 : f32 to vector<32x1xf32>
    %24 = arith.divf %22, %23 : vector<32x1xf32>
    %25 = vector.broadcast %24 : vector<32x1xf32> to vector<32x32xf32>
    %26 = arith.subf %20, %25 : vector<32x32xf32>
    %27 = arith.mulf %26, %26 : vector<32x32xf32>
    %cst_11 = arith.constant dense<0.000000e+00> : vector<32xf32>
    %28 = vector.multi_reduction <add>, %27, %cst_11 [1] : vector<32x32xf32> to vector<32xf32>
    %29 = vector.shape_cast %28 : vector<32xf32> to vector<32x1xf32>
    %cst_12 = arith.constant 3.200000e+01 : f32
    %30 = vector.broadcast %cst_12 : f32 to vector<32x1xf32>
    %31 = arith.divf %29, %30 : vector<32x1xf32>
    %cst_13 = arith.constant 9.99999997E-7 : f32
    %32 = vector.broadcast %cst_13 : f32 to vector<32x1xf32>
    %33 = arith.addf %31, %32 : vector<32x1xf32>
    %34 = math.rsqrt %33 : vector<32x1xf32>
    %35 = vector.broadcast %34 : vector<32x1xf32> to vector<32x32xf32>
    %36 = arith.mulf %26, %35 : vector<32x32xf32>
    %37 = vector.extract_strided_slice %0 {offsets = [0, 64], sizes = [32, 32], strides = [1, 1]} : vector<32x128xf32> to vector<32x32xf32>
    %cst_14 = arith.constant dense<0.000000e+00> : vector<32xf32>
    %38 = vector.multi_reduction <add>, %37, %cst_14 [1] : vector<32x32xf32> to vector<32xf32>
    %39 = vector.shape_cast %38 : vector<32xf32> to vector<32x1xf32>
    %cst_15 = arith.constant 3.200000e+01 : f32
    %40 = vector.broadcast %cst_15 : f32 to vector<32x1xf32>
    %41 = arith.divf %39, %40 : vector<32x1xf32>
    %42 = vector.broadcast %41 : vector<32x1xf32> to vector<32x32xf32>
    %43 = arith.subf %37, %42 : vector<32x32xf32>
    %44 = arith.mulf %43, %43 : vector<32x32xf32>
    %cst_16 = arith.constant dense<0.000000e+00> : vector<32xf32>
    %45 = vector.multi_reduction <add>, %44, %cst_16 [1] : vector<32x32xf32> to vector<32xf32>
    %46 = vector.shape_cast %45 : vector<32xf32> to vector<32x1xf32>
    %cst_17 = arith.constant 3.200000e+01 : f32
    %47 = vector.broadcast %cst_17 : f32 to vector<32x1xf32>
    %48 = arith.divf %46, %47 : vector<32x1xf32>
    %cst_18 = arith.constant 9.99999997E-7 : f32
    %49 = vector.broadcast %cst_18 : f32 to vector<32x1xf32>
    %50 = arith.addf %48, %49 : vector<32x1xf32>
    %51 = math.rsqrt %50 : vector<32x1xf32>
    %52 = vector.broadcast %51 : vector<32x1xf32> to vector<32x32xf32>
    %53 = arith.mulf %43, %52 : vector<32x32xf32>
    %54 = vector.extract_strided_slice %0 {offsets = [0, 96], sizes = [32, 32], strides = [1, 1]} : vector<32x128xf32> to vector<32x32xf32>
    %cst_19 = arith.constant dense<0.000000e+00> : vector<32xf32>
    %55 = vector.multi_reduction <add>, %54, %cst_19 [1] : vector<32x32xf32> to vector<32xf32>
    %56 = vector.shape_cast %55 : vector<32xf32> to vector<32x1xf32>
    %cst_20 = arith.constant 3.200000e+01 : f32
    %57 = vector.broadcast %cst_20 : f32 to vector<32x1xf32>
    %58 = arith.divf %56, %57 : vector<32x1xf32>
    %59 = vector.broadcast %58 : vector<32x1xf32> to vector<32x32xf32>
    %60 = arith.subf %54, %59 : vector<32x32xf32>
    %61 = arith.mulf %60, %60 : vector<32x32xf32>
    %cst_21 = arith.constant dense<0.000000e+00> : vector<32xf32>
    %62 = vector.multi_reduction <add>, %61, %cst_21 [1] : vector<32x32xf32> to vector<32xf32>
    %63 = vector.shape_cast %62 : vector<32xf32> to vector<32x1xf32>
    %cst_22 = arith.constant 3.200000e+01 : f32
    %64 = vector.broadcast %cst_22 : f32 to vector<32x1xf32>
    %65 = arith.divf %63, %64 : vector<32x1xf32>
    %cst_23 = arith.constant 9.99999997E-7 : f32
    %66 = vector.broadcast %cst_23 : f32 to vector<32x1xf32>
    %67 = arith.addf %65, %66 : vector<32x1xf32>
    %68 = math.rsqrt %67 : vector<32x1xf32>
    %69 = vector.broadcast %68 : vector<32x1xf32> to vector<32x32xf32>
    %70 = arith.mulf %60, %69 : vector<32x32xf32>
    %71 = tpu.concatenate %19, %36, %53, %70 in 1 : vector<32x32xf32>, vector<32x32xf32>, vector<32x32xf32>, vector<32x32xf32> -> vector<32x128xf32>
    %72 = vector.broadcast %1 : vector<1x128xf32> to vector<32x128xf32>
    %73 = arith.mulf %71, %72 : vector<32x128xf32>
    %74 = vector.broadcast %2 : vector<1x128xf32> to vector<32x128xf32>
    %75 = arith.addf %73, %74 : vector<32x128xf32>
    %c0_24 = arith.constant 0 : index
    %c0_25 = arith.constant 0 : index
    %76 = vector.load %arg4[%c0_24, %c0_25] : memref<32x128xf32, #tpu.memory_space<vmem>>, vector<32x128xf32>
    tpu.vector_store %arg4[%c0_24, %c0_25], %75 {strides = array<i32>} : memref<32x128xf32, #tpu.memory_space<vmem>>, vector<32x128xf32>,
    return
  }
  func.func @transform_0(%arg0: i32) -> (i32, i32) {
    %c0_i32 = arith.constant 0 : i32
    %c0_i32_0 = arith.constant 0 : i32
    return %arg0, %c0_i32 : i32, i32
  }
  func.func @transform_1(%arg0: i32) -> (i32, i32) {
    %c0_i32 = arith.constant 0 : i32
    %c0_i32_0 = arith.constant 0 : i32
    %c0_i32_1 = arith.constant 0 : i32
    return %c0_i32, %c0_i32_0 : i32, i32
  }
  func.func @transform_2(%arg0: i32) -> (i32, i32) {
    %c0_i32 = arith.constant 0 : i32
    %c0_i32_0 = arith.constant 0 : i32
    %c0_i32_1 = arith.constant 0 : i32
    return %c0_i32, %c0_i32_0 : i32, i32
  }
  func.func @transform_3(%arg0: i32) -> (i32, i32) {
    %c0_i32 = arith.constant 0 : i32
    %c0_i32_0 = arith.constant 0 : i32
    return %arg0, %c0_i32 : i32, i32
  }
}

</mosaic_0001>

<llo_original>
// kernel: _layernorm_lastdim.1
$region0: #{_layernorm_lastdim.1}
  #allocation0 [shape = 'u32[]', space=smem, size = 0x4, offset = 0x4, fixed_abs, tag = 'smem constant byte address 0x4 - core index']
  #allocation1 [shape = 'u32[144,128]{1,0:T(1,128)}', space=vmem, size = 0x12000, scoped, tag = 'internal scratch']
  %s0 = inlined_call_operand.vmem [shape: f32[32,128], index: 0, kind: input, shape index: {}]
  %s1 = inlined_call_operand.vmem [shape: f32[1,128], index: 1, kind: input, shape index: {}]
  %s2 = inlined_call_operand.vmem [shape: f32[1,128], index: 2, kind: input, shape index: {}]
  %s3 = inlined_call_operand.vmem [shape: f32[32,128], index: 3, kind: output, shape index: {}]
  %s4 = sld [smem:[#allocation0]]
  $region22: #{_layernorm_lastdim.1} parent=0
    _
  %s6 = ssub.s32 1, %s4
  %s7 = scalar_select 0, %s6, %s4
  // Predicated region
  $region2: #{_layernorm_lastdim.1} parent=0 // pred_check
    _
  $region3: #{_layernorm_lastdim.1} parent=0 // pred_check_branch
    %9 = sbr.rel (0) target = $region5
  $region4: #{_layernorm_lastdim.1} parent=0 // pred_region
    _
  $region5: #{_layernorm_lastdim.1} parent=0 // pred_fallthru
    _
  // Predicated region
  $region6: #{_layernorm_lastdim.1} parent=0 // pred_check
    _
  $region7: #{_layernorm_lastdim.1} parent=0 // pred_check_branch
    %11 = sbr.rel (0) target = $region9
  $region8: #{_layernorm_lastdim.1} parent=0 // pred_region
    _
  $region9: #{_layernorm_lastdim.1} parent=0 // pred_fallthru
    _
  // Predicated region
  $region10: #{_layernorm_lastdim.1} parent=0 // pred_check
    _
  $region11: #{_layernorm_lastdim.1} parent=0 // pred_check_branch
    %13 = sbr.rel (0) target = $region13
  $region12: #{_layernorm_lastdim.1} parent=0 // pred_region
    _
  $region13: #{_layernorm_lastdim.1} parent=0 // pred_fallthru
    _
  %v14 = vld [vmem:[%s0] sm:$0xff]
  %v15 = vld [vmem:[%s0 + $0x8] sm:$0xff]
  %v16 = vld [vmem:[%s0 + $0x10] sm:$0xff]
  %v17 = vld [vmem:[%s0 + $0x18] sm:$0xff]
  %v18 = vld [vmem:[%s1] sm:$0x1]
  %v19 = vld [vmem:[%s2] sm:$0x1]
  %vm20 = vcmask 261120
  %v21 = vsel %vm20, %v14, 0.0
  %22 = vadd.xlane.f32.xlu0 %v21
  %v23 = vpop.xlane.xlu0 %22
  %v24 = vsel %vm20, %v15, 0.0
  %25 = vadd.xlane.f32.xlu0 %v24
  %v26 = vpop.xlane.xlu0 %25
  %v27 = vsel %vm20, %v16, 0.0
  %28 = vadd.xlane.f32.xlu0 %v27
  %v29 = vpop.xlane.xlu0 %28
  %v30 = vsel %vm20, %v17, 0.0
  %31 = vadd.xlane.f32.xlu0 %v30
  %v32 = vpop.xlane.xlu0 %31
  %v33 = vrcp.pop 32.0
  %v34 = vmul.f32 %v23, %v33
  %v35 = vmul.f32 %v26, %v33
  %v36 = vmul.f32 %v29, %v33
  %v37 = vmul.f32 %v32, %v33
  %v38 = vsub.f32 %v14, %v34
  %v39 = vsub.f32 %v15, %v35
  %v40 = vsub.f32 %v16, %v36
  %v41 = vsub.f32 %v17, %v37
  %v42 = vmul.f32 %v38, %v38
  %v43 = vmul.f32 %v39, %v39
  %v44 = vmul.f32 %v40, %v40
  %v45 = vmul.f32 %v41, %v41
  %v46 = vsel %vm20, %v42, 0.0
  %47 = vadd.xlane.f32.xlu0 %v46
  %v48 = vpop.xlane.xlu0 %47
  %v49 = vsel %vm20, %v43, 0.0
  %50 = vadd.xlane.f32.xlu0 %v49
  %v51 = vpop.xlane.xlu0 %50
  %v52 = vsel %vm20, %v44, 0.0
  %53 = vadd.xlane.f32.xlu0 %v52
  %v54 = vpop.xlane.xlu0 %53
  %v55 = vsel %vm20, %v45, 0.0
  %56 = vadd.xlane.f32.xlu0 %v55
  %v57 = vpop.xlane.xlu0 %56
  %v58 = vmul.f32 %v48, %v33
  %v59 = vmul.f32 %v51, %v33
  %v60 = vmul.f32 %v54, %v33
  %v61 = vmul.f32 %v57, %v33
  %v62 = vadd.f32 %v58, 1e-06
  %v63 = vadd.f32 %v59, 1e-06
  %v64 = vadd.f32 %v60, 1e-06
  %v65 = vadd.f32 %v61, 1e-06
  %v66 = vrsqrt.pop %v62
  %v67 = vrsqrt.pop %v63
  %v68 = vrsqrt.pop %v64
  %v69 = vrsqrt.pop %v65
  %v70 = vmul.f32 %v38, %v66
  %v71 = vmul.f32 %v39, %v67
  %v72 = vmul.f32 %v40, %v68
  %v73 = vmul.f32 %v41, %v69
  %78 = vrot.lane.b32.xlu0 %v14, 96
  %v79 = vpop.permute.xlu0 %78
  %80 = vrot.lane.b32.xlu0 %v15, 96
  %v81 = vpop.permute.xlu0 %80
  %82 = vrot.lane.b32.xlu0 %v16, 96
  %v83 = vpop.permute.xlu0 %82
  %84 = vrot.lane.b32.xlu0 %v17, 96
  %v85 = vpop.permute.xlu0 %84
  %v90 = vsel %vm20, %v79, 0.0
  %91 = vadd.xlane.f32.xlu0 %v90
  %v92 = vpop.xlane.xlu0 %91
  %v93 = vsel %vm20, %v81, 0.0
  %94 = vadd.xlane.f32.xlu0 %v93
  %v95 = vpop.xlane.xlu0 %94
  %v96 = vsel %vm20, %v83, 0.0
  %97 = vadd.xlane.f32.xlu0 %v96
  %v98 = vpop.xlane.xlu0 %97
  %v99 = vsel %vm20, %v85, 0.0
  %100 = vadd.xlane.f32.xlu0 %v99
  %v101 = vpop.xlane.xlu0 %100
  %v102 = vmul.f32 %v92, %v33
  %v103 = vmul.f32 %v95, %v33
  %v104 = vmul.f32 %v98, %v33
  %v105 = vmul.f32 %v101, %v33
  %v106 = vsub.f32 %v14, %v102
  %v107 = vsub.f32 %v15, %v103
  %v108 = vsub.f32 %v16, %v104
  %v109 = vsub.f32 %v17, %v105
  %v110 = vmul.f32 %v106, %v106
  %v111 = vmul.f32 %v107, %v107
  %v112 = vmul.f32 %v108, %v108
  %v113 = vmul.f32 %v109, %v109
  %118 = vrot.lane.b32.xlu0 %v110, 96
  %v119 = vpop.permute.xlu0 %118
  %120 = vrot.lane.b32.xlu0 %v111, 96
  %v121 = vpop.permute.xlu0 %120
  %122 = vrot.lane.b32.xlu0 %v112, 96
  %v123 = vpop.permute.xlu0 %122
  %124 = vrot.lane.b32.xlu0 %v113, 96
  %v125 = vpop.permute.xlu0 %124
  %v130 = vsel %vm20, %v119, 0.0
  %131 = vadd.xlane.f32.xlu0 %v130
  %v132 = vpop.xlane.xlu0 %131
  %v133 = vsel %vm20, %v121, 0.0
  %134 = vadd.xlane.f32.xlu0 %v133
  %v135 = vpop.xlane.xlu0 %134
  %v136 = vsel %vm20, %v123, 0.0
  %137 = vadd.xlane.f32.xlu0 %v136
  %v138 = vpop.xlane.xlu0 %137
  %v139 = vsel %vm20, %v125, 0.0
  %140 = vadd.xlane.f32.xlu0 %v139
  %v141 = vpop.xlane.xlu0 %140
  %v142 = vmul.f32 %v132, %v33
  %v143 = vmul.f32 %v135, %v33
  %v144 = vmul.f32 %v138, %v33
  %v145 = vmul.f32 %v141, %v33
  %v146 = vadd.f32 %v142, 1e-06
  %v147 = vadd.f32 %v143, 1e-06
  %v148 = vadd.f32 %v144, 1e-06
  %v149 = vadd.f32 %v145, 1e-06
  %v150 = vrsqrt.pop %v146
  %v151 = vrsqrt.pop %v147
  %v152 = vrsqrt.pop %v148
  %v153 = vrsqrt.pop %v149
  %v154 = vmul.f32 %v106, %v150
  %v155 = vmul.f32 %v107, %v151
  %v156 = vmul.f32 %v108, %v152
  %v157 = vmul.f32 %v109, %v153
  %158 = vrot.lane.b32.xlu0 %v14, 64
  %v159 = vpop.permute.xlu0 %158
  %160 = vrot.lane.b32.xlu0 %v15, 64
  %v161 = vpop.permute.xlu0 %160
  %162 = vrot.lane.b32.xlu0 %v16, 64
  %v163 = vpop.permute.xlu0 %162
  %164 = vrot.lane.b32.xlu0 %v17, 64
  %v165 = vpop.permute.xlu0 %164
  %v170 = vsel %vm20, %v159, 0.0
  %171 = vadd.xlane.f32.xlu0 %v170
  %v172 = vpop.xlane.xlu0 %171
  %v173 = vsel %vm20, %v161, 0.0
  %174 = vadd.xlane.f32.xlu0 %v173
  %v175 = vpop.xlane.xlu0 %174
  %v176 = vsel %vm20, %v163, 0.0
  %177 = vadd.xlane.f32.xlu0 %v176
  %v178 = vpop.xlane.xlu0 %177
  %v179 = vsel %vm20, %v165, 0.0
  %180 = vadd.xlane.f32.xlu0 %v179
  %v181 = vpop.xlane.xlu0 %180
  %v182 = vmul.f32 %v172, %v33
  %v183 = vmul.f32 %v175, %v33
  %v184 = vmul.f32 %v178, %v33
  %v185 = vmul.f32 %v181, %v33
  %v186 = vsub.f32 %v14, %v182
  %v187 = vsub.f32 %v15, %v183
  %v188 = vsub.f32 %v16, %v184
  %v189 = vsub.f32 %v17, %v185
  %v190 = vmul.f32 %v186, %v186
  %v191 = vmul.f32 %v187, %v187
  %v192 = vmul.f32 %v188, %v188
  %v193 = vmul.f32 %v189, %v189
  %198 = vrot.lane.b32.xlu0 %v190, 64
  %v199 = vpop.permute.xlu0 %198
  %200 = vrot.lane.b32.xlu0 %v191, 64
  %v201 = vpop.permute.xlu0 %200
  %202 = vrot.lane.b32.xlu0 %v192, 64
  %v203 = vpop.permute.xlu0 %202
  %204 = vrot.lane.b32.xlu0 %v193, 64
  %v205 = vpop.permute.xlu0 %204
  %v210 = vsel %vm20, %v199, 0.0
  %211 = vadd.xlane.f32.xlu0 %v210
  %v212 = vpop.xlane.xlu0 %211
  %v213 = vsel %vm20, %v201, 0.0
  %214 = vadd.xlane.f32.xlu0 %v213
  %v215 = vpop.xlane.xlu0 %214
  %v216 = vsel %vm20, %v203, 0.0
  %217 = vadd.xlane.f32.xlu0 %v216
  %v218 = vpop.xlane.xlu0 %217
  %v219 = vsel %vm20, %v205, 0.0
  %220 = vadd.xlane.f32.xlu0 %v219
  %v221 = vpop.xlane.xlu0 %220
  %v222 = vmul.f32 %v212, %v33
  %v223 = vmul.f32 %v215, %v33
  %v224 = vmul.f32 %v218, %v33
  %v225 = vmul.f32 %v221, %v33
  %v226 = vadd.f32 %v222, 1e-06
  %v227 = vadd.f32 %v223, 1e-06
  %v228 = vadd.f32 %v224, 1e-06
  %v229 = vadd.f32 %v225, 1e-06
  %v230 = vrsqrt.pop %v226
  %v231 = vrsqrt.pop %v227
  %v232 = vrsqrt.pop %v228
  %v233 = vrsqrt.pop %v229
  %v234 = vmul.f32 %v186, %v230
  %v235 = vmul.f32 %v187, %v231
  %v236 = vmul.f32 %v188, %v232
  %v237 = vmul.f32 %v189, %v233
  %238 = vrot.lane.b32.xlu0 %v14, 32
  %v239 = vpop.permute.xlu0 %238
  %240 = vrot.lane.b32.xlu0 %v15, 32
  %v241 = vpop.permute.xlu0 %240
  %242 = vrot.lane.b32.xlu0 %v16, 32
  %v243 = vpop.permute.xlu0 %242
  %244 = vrot.lane.b32.xlu0 %v17, 32
  %v245 = vpop.permute.xlu0 %244
  %v250 = vsel %vm20, %v239, 0.0
  %251 = vadd.xlane.f32.xlu0 %v250
  %v252 = vpop.xlane.xlu0 %251
  %v253 = vsel %vm20, %v241, 0.0
  %254 = vadd.xlane.f32.xlu0 %v253
  %v255 = vpop.xlane.xlu0 %254
  %v256 = vsel %vm20, %v243, 0.0
  %257 = vadd.xlane.f32.xlu0 %v256
  %v258 = vpop.xlane.xlu0 %257
  %v259 = vsel %vm20, %v245, 0.0
  %260 = vadd.xlane.f32.xlu0 %v259
  %v261 = vpop.xlane.xlu0 %260
  %v262 = vmul.f32 %v252, %v33
  %v263 = vmul.f32 %v255, %v33
  %v264 = vmul.f32 %v258, %v33
  %v265 = vmul.f32 %v261, %v33
  %v266 = vsub.f32 %v14, %v262
  %v267 = vsub.f32 %v15, %v263
  %v268 = vsub.f32 %v16, %v264
  %v269 = vsub.f32 %v17, %v265
  %v270 = vmul.f32 %v266, %v266
  %v271 = vmul.f32 %v267, %v267
  %v272 = vmul.f32 %v268, %v268
  %v273 = vmul.f32 %v269, %v269
  %278 = vrot.lane.b32.xlu0 %v270, 32
  %v279 = vpop.permute.xlu0 %278
  %280 = vrot.lane.b32.xlu0 %v271, 32
  %v281 = vpop.permute.xlu0 %280
  %282 = vrot.lane.b32.xlu0 %v272, 32
  %v283 = vpop.permute.xlu0 %282
  %284 = vrot.lane.b32.xlu0 %v273, 32
  %v285 = vpop.permute.xlu0 %284
  %v290 = vsel %vm20, %v279, 0.0
  %291 = vadd.xlane.f32.xlu0 %v290
  %v292 = vpop.xlane.xlu0 %291
  %v293 = vsel %vm20, %v281, 0.0
  %294 = vadd.xlane.f32.xlu0 %v293
  %v295 = vpop.xlane.xlu0 %294
  %v296 = vsel %vm20, %v283, 0.0
  %297 = vadd.xlane.f32.xlu0 %v296
  %v298 = vpop.xlane.xlu0 %297
  %v299 = vsel %vm20, %v285, 0.0
  %300 = vadd.xlane.f32.xlu0 %v299
  %v301 = vpop.xlane.xlu0 %300
  %v302 = vmul.f32 %v292, %v33
  %v303 = vmul.f32 %v295, %v33
  %v304 = vmul.f32 %v298, %v33
  %v305 = vmul.f32 %v301, %v33
  %v306 = vadd.f32 %v302, 1e-06
  %v307 = vadd.f32 %v303, 1e-06
  %v308 = vadd.f32 %v304, 1e-06
  %v309 = vadd.f32 %v305, 1e-06
  %v310 = vrsqrt.pop %v306
  %v311 = vrsqrt.pop %v307
  %v312 = vrsqrt.pop %v308
  %v313 = vrsqrt.pop %v309
  %v314 = vmul.f32 %v266, %v310
  %v315 = vmul.f32 %v267, %v311
  %v316 = vmul.f32 %v268, %v312
  %v317 = vmul.f32 %v269, %v313
  %v318 = vsel %vm20, %v70, %v154
  %v319 = vsel %vm20, %v71, %v155
  %v320 = vsel %vm20, %v72, %v156
  %v321 = vsel %vm20, %v73, %v157
  %vm322 = vcmask 523264
  %v323 = vsel %vm322, %v318, %v234
  %v324 = vsel %vm322, %v319, %v235
  %v325 = vsel %vm322, %v320, %v236
  %v326 = vsel %vm322, %v321, %v237
  %vm327 = vcmask 785408
  %v328 = vsel %vm327, %v323, %v314
  %v329 = vsel %vm327, %v324, %v315
  %v330 = vsel %vm327, %v325, %v316
  %v331 = vsel %vm327, %v326, %v317
  %v333 = vlaneseq
  %v334 = vshrl.u32 %v333, 7
  %v335 = vsub.s32 0, %v334
  %v336 = vrot.slane %v18, %v335
  %v338 = vmul.f32 %v328, %v336
  %v339 = vmul.f32 %v329, %v336
  %v340 = vmul.f32 %v330, %v336
  %v341 = vmul.f32 %v331, %v336
  %v343 = vlaneseq
  %v344 = vshrl.u32 %v343, 7
  %v345 = vsub.s32 0, %v344
  %v346 = vrot.slane %v19, %v345
  %v348 = vadd.f32 %v338, %v346
  %v349 = vadd.f32 %v339, %v346
  %v350 = vadd.f32 %v340, %v346
  %v351 = vadd.f32 %v341, %v346
  %352 = vst [vmem:[%s3] sm:$0xff] %v348
  %353 = vst [vmem:[%s3 + $0x8] sm:$0xff] %v349
  %354 = vst [vmem:[%s3 + $0x10] sm:$0xff] %v350
  %355 = vst [vmem:[%s3 + $0x18] sm:$0xff] %v351
  // Predicated region
  $region14: #{_layernorm_lastdim.1} parent=0 // pred_check
    _
  $region15: #{_layernorm_lastdim.1} parent=0 // pred_check_branch
    %357 = sbr.rel (0) target = $region17
  $region16: #{_layernorm_lastdim.1} parent=0 // pred_region
    _
  $region17: #{_layernorm_lastdim.1} parent=0 // pred_fallthru
    _
  // Predicated region
  $region18: #{_layernorm_lastdim.1} parent=0 // pred_check
    _
  $region19: #{_layernorm_lastdim.1} parent=0 // pred_check_branch
    %359 = sbr.rel (0) target = $region21
  $region20: #{_layernorm_lastdim.1} parent=0 // pred_region
    _
  $region21: #{_layernorm_lastdim.1} parent=0 // pred_fallthru
    _

</llo_original>
